<compile_context>
chip_gen: v7x
topology: tpu7x:2x2x1
jax: 0.10.0
libtpu: 0.0.40
codegen_flags: <defaults>
</compile_context>

<pallas_src>
import functools

import jax
import jax.numpy as jnp
from jax import lax
from jax.experimental import pallas as pl
from jax.experimental.pallas import tpu as pltpu


def _band_weights(w_hwio, width):
    """Fold the W axis of a small-channel conv (incl. its 'same' zero padding)
    into per-row-tap banded matmul weights:
        G[ky, w_in*Ci + ci, w_out*Co + co] = w[ky, w_in - w_out + pw, ci, co]
    inside the band, zero outside.  Each row tap of the conv then becomes ONE
    lane-dense matmul  (rows, W*Ci) @ (W*Ci, W*Co)  whose result already has the
    (w, co) lane layout of the output."""
    kh, kw, ci, co = w_hwio.shape
    pw = kw // 2
    w_in = jnp.arange(width)[:, None]
    w_out = jnp.arange(width)[None, :]
    kx = w_in - w_out + pw                                      # (W, W)
    valid = ((kx >= 0) & (kx < kw)).astype(w_hwio.dtype)
    kx = jnp.clip(kx, 0, kw - 1)
    taps = w_hwio[:, kx, :, :] * valid[None, :, :, None, None]  # (kh, W, W, ci, co)
    return taps.transpose(0, 1, 3, 2, 4).reshape(kh, width * ci, width * co)


def _conv_mod_kernel(x_ref, mod_ref, g1_ref, b1_ref, g2_ref, b2_ref, o_ref,
                     *, op, kh, ph, height, tile_h):
    # x_ref / o_ref : (TH, W*Cout)            lane-dense tile of this (n, h-tile)
    # mod_ref       : (H,  W*Cin)             full-height modulation (resident)
    # g1_ref        : (kh, W*Cin,  W*Cout)    banded conv1 weights
    # g2_ref        : (kh, W*Cout, W*Cout)    banded conv2 weights
    # b1_ref/b2_ref : (1,  W*Cout)            lane-tiled biases
    t = pl.program_id(1)
    TH = tile_h
    lanes = o_ref.shape[-1]
    R1 = TH + 2 * ph                    # conv1 rows needed by conv2's row taps
    r0 = t * TH                         # first output row of this tile
    if TH % 8 == 0:
        r0 = pl.multiple_of(r0, 8)

    # ---- gather modulation rows [r0-2ph, r0+TH+2ph) with zero 'same' padding.
    interior = mod_ref[pl.ds(r0, TH), :]
    if ph > 0:
        top = mod_ref[pl.ds(jnp.maximum(r0 - 2 * ph, 0), 2 * ph), :]
        bot = mod_ref[pl.ds(jnp.minimum(r0 + TH, height - 2 * ph), 2 * ph), :]
        mod_pad = jnp.concatenate([top, interior, bot], axis=0)
        rows = lax.broadcasted_iota(jnp.int32, (TH + 4 * ph, 1), 0) + (r0 - 2 * ph)
        mod_pad = jnp.where((rows >= 0) & (rows < height), mod_pad, 0.0)
    else:
        mod_pad = interior

    # ---- conv1 + bias + ReLU: kh banded, lane-dense MXU matmuls.
    acc1 = jnp.zeros((R1, lanes), jnp.float32)
    for ky in range(kh):
        acc1 = acc1 + jnp.dot(mod_pad[ky:ky + R1, :], g1_ref[ky, :, :],
                              preferred_element_type=jnp.float32)
    h1 = jnp.maximum(acc1 + b1_ref[...], 0.0)

    # Rows of h1 that fall outside the image are conv2's zero 'same' padding,
    # not conv1 outputs -> mask them to zero.
    if ph > 0:
        rows1 = lax.broadcasted_iota(jnp.int32, (R1, 1), 0) + (r0 - ph)
        h1 = jnp.where((rows1 >= 0) & (rows1 < height), h1, 0.0)

    # ---- conv2 + bias.
    acc2 = jnp.zeros((TH, lanes), jnp.float32)
    for ky in range(kh):
        acc2 = acc2 + jnp.dot(h1[ky:ky + TH, :], g2_ref[ky, :, :],
                              preferred_element_type=jnp.float32)
    mod2 = acc2 + b2_ref[...]

    # ---- modulate x (dense, lane-aligned store).
    xv = x_ref[...]
    if op == "add":
        o_ref[...] = (xv + mod2).astype(o_ref.dtype)
    else:  # "mul"
        o_ref[...] = (xv * jax.nn.sigmoid(mod2)).astype(o_ref.dtype)


def conv_modulation(x, modulation, w1, b1, w2, b2, op="mul", tile_h=None):
    """x: (N,H,W,Cout) NHWC.  modulation: (N,H,W,Cin) NHWC.  w*: HWIO.  b*: (C,)."""
    if op not in ("add", "mul"):
        raise NotImplementedError(f"Op {op} is not supported")
    N, H, W, Cin = modulation.shape
    kh, kw, _, Cout = w1.shape
    if kh % 2 == 0 or kw % 2 == 0:
        raise ValueError("odd kernel sizes required for 'same' padding")
    ph = kh // 2

    if tile_h is None:
        tile_h = H
        if H > 256:  # cap the per-step working set (v7x has 64 MiB VMEM)
            for cand in (256, 128, 64, 32, 16, 8):
                if H % cand == 0:
                    tile_h = cand
                    break
    TH = tile_h
    if TH != H and (H % TH != 0 or TH % 8 != 0):
        raise ValueError("tile_h must divide H and be a multiple of 8 (or equal H)")
    if TH < 2 * ph or H < 2 * ph:
        raise ValueError("tile/height too small for the conv row halo")
    n_ht = H // TH
    in_lanes = W * Cin
    lanes = W * Cout

    # Lane-dense (rows, W*C) activation layouts; row-major reshapes are free.
    x2 = x.reshape(N, H, lanes).astype(jnp.float32)
    m2 = modulation.reshape(N, H, in_lanes).astype(jnp.float32)

    # Banded matmul weights + lane-tiled biases (tiny, built once on the host).
    g1 = _band_weights(w1.astype(jnp.float32), W)          # (kh, W*Cin,  W*Cout)
    g2 = _band_weights(w2.astype(jnp.float32), W)          # (kh, W*Cout, W*Cout)
    b1r = jnp.tile(b1.astype(jnp.float32), W).reshape(1, lanes)
    b2r = jnp.tile(b2.astype(jnp.float32), W).reshape(1, lanes)

    kernel = functools.partial(_conv_mod_kernel, op=op, kh=kh, ph=ph,
                               height=H, tile_h=TH)

    out = pl.pallas_call(
        kernel,
        out_shape=jax.ShapeDtypeStruct((N, H, lanes), jnp.float32),
        grid_spec=pltpu.PrefetchScalarGridSpec(
            num_scalar_prefetch=0,
            grid=(N, n_ht),
            in_specs=[
                pl.BlockSpec((None, TH, lanes), lambda n, t: (n, t, 0)),      # x tile
                pl.BlockSpec((None, H, in_lanes), lambda n, t: (n, 0, 0)),    # modulation (full H)
                pl.BlockSpec((kh, in_lanes, lanes), lambda n, t: (0, 0, 0)),  # conv1 band
                pl.BlockSpec((1, lanes), lambda n, t: (0, 0)),                # conv1 bias
                pl.BlockSpec((kh, lanes, lanes), lambda n, t: (0, 0, 0)),     # conv2 band
                pl.BlockSpec((1, lanes), lambda n, t: (0, 0)),                # conv2 bias
            ],
            out_specs=pl.BlockSpec((None, TH, lanes), lambda n, t: (n, t, 0)),
        ),
        compiler_params=pltpu.CompilerParams(
            dimension_semantics=("parallel", "parallel"),
        ),
    )(x2, m2, g1, b1r, g2, b2r)

    # TODO(synk): `use_cache` / `self.cached` is Python-side statefulness; caching
    # the conv output across calls is left to the caller (no in-kernel equivalent).
    return out.reshape(N, H, W, Cout).astype(x.dtype)


def _reference(x, modulation, w1, b1, w2, b2, op="mul"):
    """Pure-JAX reference (NHWC / HWIO) mirroring the PyTorch module."""
    dn = ("NHWC", "HWIO", "NHWC")
    h = lax.conv_general_dilated(modulation, w1, (1, 1), "SAME",
                                 dimension_numbers=dn) + b1
    h = jnp.maximum(h, 0.0)
    m = lax.conv_general_dilated(h, w2, (1, 1), "SAME",
                                 dimension_numbers=dn) + b2
    if op == "add":
        return x + m
    return x * jax.nn.sigmoid(m)


if __name__ == "__main__":
    key = jax.random.PRNGKey(0)
    k_x, k_m, k_w1, k_b1, k_w2, k_b2 = jax.random.split(key, 6)

    # Small shapes consistent with the module: in_channels=4, out_channels=4, 3x3.
    N, H, W = 2, 16, 16
    Cin, Cout = 4, 4
    kh, kw = 3, 3

    x = jax.random.normal(k_x, (N, H, W, Cout), jnp.float32)
    modulation = jax.random.normal(k_m, (N, H, W, Cin), jnp.float32)
    w1 = jax.random.normal(k_w1, (kh, kw, Cin, Cout), jnp.float32) * 0.1
    b1 = jax.random.normal(k_b1, (Cout,), jnp.float32) * 0.1
    w2 = jax.random.normal(k_w2, (kh, kw, Cout, Cout), jnp.float32) * 0.1
    b2 = jax.random.normal(k_b2, (Cout,), jnp.float32) * 0.1

    ref_mul = _reference(x, modulation, w1, b1, w2, b2, op="mul")
    ref_add = _reference(x, modulation, w1, b1, w2, b2, op="add")

    out_mul = jax.block_until_ready(
        conv_modulation(x, modulation, w1, b1, w2, b2, op="mul"))
    assert out_mul.shape == ref_mul.shape and out_mul.dtype == ref_mul.dtype
    assert jnp.allclose(out_mul, ref_mul, rtol=1e-4, atol=1e-4), "mismatch vs reference (mul)"

    out_add = jax.block_until_ready(
        conv_modulation(x, modulation, w1, b1, w2, b2, op="add"))
    assert jnp.allclose(out_add, ref_add, rtol=1e-4, atol=1e-4), "mismatch vs reference (add)"

    # Multi-row-tile path (exercises the H-halo gather/mask): 2 tiles of 8 rows.
    out_t = jax.block_until_ready(
        conv_modulation(x, modulation, w1, b1, w2, b2, op="mul", tile_h=8))
    assert jnp.allclose(out_t, ref_mul, rtol=1e-4, atol=1e-4), "mismatch vs reference (tiled)"

    print("KERNEL_OK")
</pallas_src>

<mosaic_0001>
module attributes {stable_mosaic.version = 11 : i64} {
  func.func @_conv_mod_kernel(%arg0: i32, %arg1: i32, %arg2: memref<1x16x64xf32, #tpu.memory_space<vmem>>, %arg3: memref<1x16x64xf32, #tpu.memory_space<vmem>>, %arg4: memref<3x64x64xf32, #tpu.memory_space<vmem>>, %arg5: memref<1x64xf32, #tpu.memory_space<vmem>>, %arg6: memref<3x64x64xf32, #tpu.memory_space<vmem>>, %arg7: memref<1x64xf32, #tpu.memory_space<vmem>>, %arg8: memref<1x16x64xf32, #tpu.memory_space<vmem>>) attributes {dimension_semantics = [#tpu.dimension_semantics<parallel>, #tpu.dimension_semantics<parallel>], iteration_bounds = array<i64: 2, 1>, scalar_prefetch = 0 : i64, scratch_operands = 0 : i64, tpu.core_type = #tpu.core_type<tc>, window_params = [{transform_indices = @transform_0, window_bounds = array<i64: 1, 16, 64>}, {transform_indices = @transform_1, window_bounds = array<i64: 1, 16, 64>}, {pipeline_mode = #tpu.pipeline_mode<synchronous>, transform_indices = @transform_2, window_bounds = array<i64: 3, 64, 64>}, {pipeline_mode = #tpu.pipeline_mode<synchronous>, transform_indices = @transform_3, window_bounds = array<i64: 1, 64>}, {pipeline_mode = #tpu.pipeline_mode<synchronous>, transform_indices = @transform_4, window_bounds = array<i64: 3, 64, 64>}, {pipeline_mode = #tpu.pipeline_mode<synchronous>, transform_indices = @transform_5, window_bounds = array<i64: 1, 64>}, {transform_indices = @transform_6, window_bounds = array<i64: 1, 16, 64>}]} {
    %c16_i32 = arith.constant 16 : i32
    %0 = arith.muli %arg1, %c16_i32 : i32
    %1 = tpu.assume_multiple %0, 8 : i32
    %c0 = arith.constant 0 : index
    %2 = arith.index_cast %1 : i32 to index
    %c0_0 = arith.constant 0 : index
    %3 = vector.load %arg3[%c0, %2, %c0_0] : memref<1x16x64xf32, #tpu.memory_space<vmem>>, vector<1x16x64xf32>
    %4 = vector.shape_cast %3 : vector<1x16x64xf32> to vector<16x64xf32>
    %c2_i32 = arith.constant 2 : i32
    %5 = arith.subi %1, %c2_i32 : i32
    %c0_i32 = arith.constant 0 : i32
    %6 = arith.maxsi %5, %c0_i32 : i32
    %c0_1 = arith.constant 0 : index
    %7 = arith.index_cast %6 : i32 to index
    %c0_2 = arith.constant 0 : index
    %8 = vector.load %arg3[%c0_1, %7, %c0_2] : memref<1x16x64xf32, #tpu.memory_space<vmem>>, vector<1x2x64xf32>
    %9 = vector.shape_cast %8 : vector<1x2x64xf32> to vector<2x64xf32>
    %c16_i32_3 = arith.constant 16 : i32
    %10 = arith.addi %1, %c16_i32_3 : i32
    %c14_i32 = arith.constant 14 : i32
    %11 = arith.minsi %10, %c14_i32 : i32
    %c0_4 = arith.constant 0 : index
    %12 = arith.index_cast %11 : i32 to index
    %c0_5 = arith.constant 0 : index
    %13 = vector.load %arg3[%c0_4, %12, %c0_5] : memref<1x16x64xf32, #tpu.memory_space<vmem>>, vector<1x2x64xf32>
    %14 = vector.shape_cast %13 : vector<1x2x64xf32> to vector<2x64xf32>
    %15 = tpu.concatenate %9, %4, %14 in 0 : vector<2x64xf32>, vector<16x64xf32>, vector<2x64xf32> -> vector<20x64xf32>
    %16 = tpu.iota {dimensions = array<i32: 0>} : vector<20x1xi32>
    %c2_i32_6 = arith.constant 2 : i32
    %17 = arith.subi %1, %c2_i32_6 : i32
    %18 = vector.broadcast %17 : i32 to vector<20x1xi32>
    %19 = arith.addi %16, %18 : vector<20x1xi32>
    %c0_i32_7 = arith.constant 0 : i32
    %20 = vector.broadcast %c0_i32_7 : i32 to vector<20x1xi32>
    %21 = arith.cmpi sge, %19, %20 : vector<20x1xi32>
    %c16_i32_8 = arith.constant 16 : i32
    %22 = vector.broadcast %c16_i32_8 : i32 to vector<20x1xi32>
    %23 = arith.cmpi slt, %19, %22 : vector<20x1xi32>
    %24 = arith.andi %21, %23 : vector<20x1xi1>
    %cst = arith.constant 0.000000e+00 : f32
    %25 = vector.shape_cast %24 : vector<20x1xi1> to vector<20x1xi1>
    %26 = vector.broadcast %25 : vector<20x1xi1> to vector<20x64xi1>
    %27 = vector.broadcast %cst : f32 to vector<20x64xf32>
    %28 = arith.select %26, %15, %27 : vector<20x64xi1>, vector<20x64xf32>
    %cst_9 = arith.constant 0.000000e+00 : f32
    %29 = vector.broadcast %cst_9 : f32 to vector<18x64xf32>
    %30 = vector.extract_strided_slice %28 {offsets = [0, 0], sizes = [18, 64], strides = [1, 1]} : vector<20x64xf32> to vector<18x64xf32>
    %c0_10 = arith.constant 0 : index
    %c0_11 = arith.constant 0 : index
    %c0_12 = arith.constant 0 : index
    %31 = vector.load %arg4[%c0_10, %c0_11, %c0_12] : memref<3x64x64xf32, #tpu.memory_space<vmem>>, vector<1x64x64xf32>
    %32 = vector.shape_cast %31 : vector<1x64x64xf32> to vector<64x64xf32>
    %cst_13 = arith.constant dense<0.000000e+00> : vector<18x64xf32>
    %33 = tpu.matmul %30, %32, %cst_13 {dimension_numbers = #tpu.dot_dimension_numbers<[1], [0], [0], [1], [0, 0, 1, 1], [], []>} : vector<18x64xf32>, vector<64x64xf32>, vector<18x64xf32> -> vector<18x64xf32>
    %34 = arith.addf %29, %33 : vector<18x64xf32>
    %35 = vector.extract_strided_slice %28 {offsets = [1, 0], sizes = [18, 64], strides = [1, 1]} : vector<20x64xf32> to vector<18x64xf32>
    %c1 = arith.constant 1 : index
    %c0_14 = arith.constant 0 : index
    %c0_15 = arith.constant 0 : index
    %36 = vector.load %arg4[%c1, %c0_14, %c0_15] : memref<3x64x64xf32, #tpu.memory_space<vmem>>, vector<1x64x64xf32>
    %37 = vector.shape_cast %36 : vector<1x64x64xf32> to vector<64x64xf32>
    %cst_16 = arith.constant dense<0.000000e+00> : vector<18x64xf32>
    %38 = tpu.matmul %35, %37, %cst_16 {dimension_numbers = #tpu.dot_dimension_numbers<[1], [0], [0], [1], [0, 0, 1, 1], [], []>} : vector<18x64xf32>, vector<64x64xf32>, vector<18x64xf32> -> vector<18x64xf32>
    %39 = arith.addf %34, %38 : vector<18x64xf32>
    %40 = vector.extract_strided_slice %28 {offsets = [2, 0], sizes = [18, 64], strides = [1, 1]} : vector<20x64xf32> to vector<18x64xf32>
    %c2 = arith.constant 2 : index
    %c0_17 = arith.constant 0 : index
    %c0_18 = arith.constant 0 : index
    %41 = vector.load %arg4[%c2, %c0_17, %c0_18] : memref<3x64x64xf32, #tpu.memory_space<vmem>>, vector<1x64x64xf32>
    %42 = vector.shape_cast %41 : vector<1x64x64xf32> to vector<64x64xf32>
    %cst_19 = arith.constant dense<0.000000e+00> : vector<18x64xf32>
    %43 = tpu.matmul %40, %42, %cst_19 {dimension_numbers = #tpu.dot_dimension_numbers<[1], [0], [0], [1], [0, 0, 1, 1], [], []>} : vector<18x64xf32>, vector<64x64xf32>, vector<18x64xf32> -> vector<18x64xf32>
    %44 = arith.addf %39, %43 : vector<18x64xf32>
    %c0_20 = arith.constant 0 : index
    %c0_21 = arith.constant 0 : index
    %45 = vector.load %arg5[%c0_20, %c0_21] : memref<1x64xf32, #tpu.memory_space<vmem>>, vector<1x64xf32>
    %46 = vector.broadcast %45 : vector<1x64xf32> to vector<18x64xf32>
    %47 = arith.addf %44, %46 : vector<18x64xf32>
    %cst_22 = arith.constant 0.000000e+00 : f32
    %48 = vector.broadcast %cst_22 : f32 to vector<18x64xf32>
    %49 = arith.maximumf %47, %48 : vector<18x64xf32>
    %50 = tpu.iota {dimensions = array<i32: 0>} : vector<18x1xi32>
    %c1_i32 = arith.constant 1 : i32
    %51 = arith.subi %1, %c1_i32 : i32
    %52 = vector.broadcast %51 : i32 to vector<18x1xi32>
    %53 = arith.addi %50, %52 : vector<18x1xi32>
    %c0_i32_23 = arith.constant 0 : i32
    %54 = vector.broadcast %c0_i32_23 : i32 to vector<18x1xi32>
    %55 = arith.cmpi sge, %53, %54 : vector<18x1xi32>
    %c16_i32_24 = arith.constant 16 : i32
    %56 = vector.broadcast %c16_i32_24 : i32 to vector<18x1xi32>
    %57 = arith.cmpi slt, %53, %56 : vector<18x1xi32>
    %58 = arith.andi %55, %57 : vector<18x1xi1>
    %cst_25 = arith.constant 0.000000e+00 : f32
    %59 = vector.shape_cast %58 : vector<18x1xi1> to vector<18x1xi1>
    %60 = vector.broadcast %59 : vector<18x1xi1> to vector<18x64xi1>
    %61 = vector.broadcast %cst_25 : f32 to vector<18x64xf32>
    %62 = arith.select %60, %49, %61 : vector<18x64xi1>, vector<18x64xf32>
    %cst_26 = arith.constant 0.000000e+00 : f32
    %63 = vector.broadcast %cst_26 : f32 to vector<16x64xf32>
    %64 = vector.extract_strided_slice %62 {offsets = [0, 0], sizes = [16, 64], strides = [1, 1]} : vector<18x64xf32> to vector<16x64xf32>
    %c0_27 = arith.constant 0 : index
    %c0_28 = arith.constant 0 : index
    %c0_29 = arith.constant 0 : index
    %65 = vector.load %arg6[%c0_27, %c0_28, %c0_29] : memref<3x64x64xf32, #tpu.memory_space<vmem>>, vector<1x64x64xf32>
    %66 = vector.shape_cast %65 : vector<1x64x64xf32> to vector<64x64xf32>
    %cst_30 = arith.constant dense<0.000000e+00> : vector<16x64xf32>
    %67 = tpu.matmul %64, %66, %cst_30 {dimension_numbers = #tpu.dot_dimension_numbers<[1], [0], [0], [1], [0, 0, 1, 1], [], []>} : vector<16x64xf32>, vector<64x64xf32>, vector<16x64xf32> -> vector<16x64xf32>
    %68 = arith.addf %63, %67 : vector<16x64xf32>
    %69 = vector.extract_strided_slice %62 {offsets = [1, 0], sizes = [16, 64], strides = [1, 1]} : vector<18x64xf32> to vector<16x64xf32>
    %c1_31 = arith.constant 1 : index
    %c0_32 = arith.constant 0 : index
    %c0_33 = arith.constant 0 : index
    %70 = vector.load %arg6[%c1_31, %c0_32, %c0_33] : memref<3x64x64xf32, #tpu.memory_space<vmem>>, vector<1x64x64xf32>
    %71 = vector.shape_cast %70 : vector<1x64x64xf32> to vector<64x64xf32>
    %cst_34 = arith.constant dense<0.000000e+00> : vector<16x64xf32>
    %72 = tpu.matmul %69, %71, %cst_34 {dimension_numbers = #tpu.dot_dimension_numbers<[1], [0], [0], [1], [0, 0, 1, 1], [], []>} : vector<16x64xf32>, vector<64x64xf32>, vector<16x64xf32> -> vector<16x64xf32>
    %73 = arith.addf %68, %72 : vector<16x64xf32>
    %74 = vector.extract_strided_slice %62 {offsets = [2, 0], sizes = [16, 64], strides = [1, 1]} : vector<18x64xf32> to vector<16x64xf32>
    %c2_35 = arith.constant 2 : index
    %c0_36 = arith.constant 0 : index
    %c0_37 = arith.constant 0 : index
    %75 = vector.load %arg6[%c2_35, %c0_36, %c0_37] : memref<3x64x64xf32, #tpu.memory_space<vmem>>, vector<1x64x64xf32>
    %76 = vector.shape_cast %75 : vector<1x64x64xf32> to vector<64x64xf32>
    %cst_38 = arith.constant dense<0.000000e+00> : vector<16x64xf32>
    %77 = tpu.matmul %74, %76, %cst_38 {dimension_numbers = #tpu.dot_dimension_numbers<[1], [0], [0], [1], [0, 0, 1, 1], [], []>} : vector<16x64xf32>, vector<64x64xf32>, vector<16x64xf32> -> vector<16x64xf32>
    %78 = arith.addf %73, %77 : vector<16x64xf32>
    %c0_39 = arith.constant 0 : index
    %c0_40 = arith.constant 0 : index
    %79 = vector.load %arg7[%c0_39, %c0_40] : memref<1x64xf32, #tpu.memory_space<vmem>>, vector<1x64xf32>
    %80 = vector.broadcast %79 : vector<1x64xf32> to vector<16x64xf32>
    %81 = arith.addf %78, %80 : vector<16x64xf32>
    %c0_41 = arith.constant 0 : index
    %c0_42 = arith.constant 0 : index
    %c0_43 = arith.constant 0 : index
    %82 = vector.load %arg2[%c0_41, %c0_42, %c0_43] : memref<1x16x64xf32, #tpu.memory_space<vmem>>, vector<1x16x64xf32>
    %83 = vector.shape_cast %82 : vector<1x16x64xf32> to vector<16x64xf32>
    %84 = arith.negf %81 : vector<16x64xf32>
    %85 = math.exp %84 : vector<16x64xf32>
    %cst_44 = arith.constant 1.000000e+00 : f32
    %86 = vector.broadcast %cst_44 : f32 to vector<16x64xf32>
    %87 = arith.addf %86, %85 : vector<16x64xf32>
    %88 = arith.divf %86, %87 : vector<16x64xf32>
    %89 = arith.mulf %83, %88 : vector<16x64xf32>
    %c0_45 = arith.constant 0 : index
    %c0_46 = arith.constant 0 : index
    %c0_47 = arith.constant 0 : index
    %90 = vector.load %arg8[%c0_45, %c0_46, %c0_47] : memref<1x16x64xf32, #tpu.memory_space<vmem>>, vector<1x16x64xf32>
    %91 = vector.shape_cast %90 : vector<1x16x64xf32> to vector<16x64xf32>
    %92 = vector.shape_cast %89 : vector<16x64xf32> to vector<1x16x64xf32>
    tpu.vector_store %arg8[%c0_45, %c0_46, %c0_47], %92 {strides = array<i32>} : memref<1x16x64xf32, #tpu.memory_space<vmem>>, vector<1x16x64xf32>,
    return
  }
  func.func @transform_0(%arg0: i32, %arg1: i32) -> (i32, i32, i32) {
    %c0_i32 = arith.constant 0 : i32
    %c0_i32_0 = arith.constant 0 : i32
    return %arg0, %arg1, %c0_i32 : i32, i32, i32
  }
  func.func @transform_1(%arg0: i32, %arg1: i32) -> (i32, i32, i32) {
    %c0_i32 = arith.constant 0 : i32
    %c0_i32_0 = arith.constant 0 : i32
    %c0_i32_1 = arith.constant 0 : i32
    return %arg0, %c0_i32, %c0_i32_0 : i32, i32, i32
  }
  func.func @transform_2(%arg0: i32, %arg1: i32) -> (i32, i32, i32) {
    %c0_i32 = arith.constant 0 : i32
    %c0_i32_0 = arith.constant 0 : i32
    %c0_i32_1 = arith.constant 0 : i32
    %c0_i32_2 = arith.constant 0 : i32
    return %c0_i32, %c0_i32_0, %c0_i32_1 : i32, i32, i32
  }
  func.func @transform_3(%arg0: i32, %arg1: i32) -> (i32, i32) {
    %c0_i32 = arith.constant 0 : i32
    %c0_i32_0 = arith.constant 0 : i32
    %c0_i32_1 = arith.constant 0 : i32
    return %c0_i32, %c0_i32_0 : i32, i32
  }
  func.func @transform_4(%arg0: i32, %arg1: i32) -> (i32, i32, i32) {
    %c0_i32 = arith.constant 0 : i32
    %c0_i32_0 = arith.constant 0 : i32
    %c0_i32_1 = arith.constant 0 : i32
    %c0_i32_2 = arith.constant 0 : i32
    return %c0_i32, %c0_i32_0, %c0_i32_1 : i32, i32, i32
  }
  func.func @transform_5(%arg0: i32, %arg1: i32) -> (i32, i32) {
    %c0_i32 = arith.constant 0 : i32
    %c0_i32_0 = arith.constant 0 : i32
    %c0_i32_1 = arith.constant 0 : i32
    return %c0_i32, %c0_i32_0 : i32, i32
  }
  func.func @transform_6(%arg0: i32, %arg1: i32) -> (i32, i32, i32) {
    %c0_i32 = arith.constant 0 : i32
    %c0_i32_0 = arith.constant 0 : i32
    return %arg0, %arg1, %c0_i32 : i32, i32, i32
  }
}

</mosaic_0001>

<llo_original>
// kernel: tpu_custom_call.1
$region0: #{tpu_custom_call.1}
  #allocation0 [shape = 'u32[]', space=smem, size = 0x4, offset = 0x4, fixed_abs, tag = 'smem constant byte address 0x4 - core index']
  #allocation1 [shape = 'u32[144,128]{1,0:T(1,128)}', space=vmem, size = 0x12000, scoped, tag = 'internal scratch']
  %s0 = inlined_call_operand.hbm [shape: f32[2,16,64], index: 0, kind: input, shape index: {}]
  %s1 = inlined_call_operand.hbm [shape: f32[2,16,64], index: 1, kind: input, shape index: {}]
  %s2 = inlined_call_operand.hbm [shape: f32[3,64,64], index: 2, kind: input, shape index: {}]
  %s3 = inlined_call_operand.vmem [shape: f32[1,64], index: 3, kind: input, shape index: {}]
  %s4 = inlined_call_operand.hbm [shape: f32[3,64,64], index: 4, kind: input, shape index: {}]
  %s5 = inlined_call_operand.vmem [shape: f32[1,64], index: 5, kind: input, shape index: {}]
  %s6 = inlined_call_operand.hbm [shape: f32[2,16,64], index: 6, kind: output, shape index: {}]
  %s7 = sld [smem:[#allocation0]]
  $region73: #{tpu_custom_call.1} parent=0
    _
  %s9 = ssub.s32 1, %s7
  %s10 = scalar_select 0, %s9, %s7
  $region1: #{tpu_custom_call.1} parent=0
    #allocation2 [shape = 'u8[16384]{0}', space=vmem, size = 0x4000, scoped, tag = 'input window, operand 0']
    #allocation3 [shape = 's32[2]{0}', space=sflag, size = 0x8, scoped, tag = 'scoped memory for tpu_custom_call.1']
    #allocation4 [shape = 's32[2]{0}', space=sflag, size = 0x8, scoped, tag = 'scoped memory for tpu_custom_call.1']
    #allocation5 [shape = 'u8[16384]{0}', space=vmem, size = 0x4000, scoped, tag = 'input window, operand 1']
    #allocation6 [shape = 's32[2]{0}', space=sflag, size = 0x8, scoped, tag = 'scoped memory for tpu_custom_call.1']
    #allocation7 [shape = 'u8[98304]{0}', space=vmem, size = 0x18000, scoped, tag = 'input window, operand 2, single buffered']
    #allocation8 [shape = 'u8[98304]{0}', space=vmem, size = 0x18000, scoped, tag = 'input window, operand 4, single buffered']
    #allocation9 [shape = 's32[1]{0}', space=sflag, size = 0x4, scoped, tag = 'scoped memory for tpu_custom_call.1']
    #allocation10 [shape = 'u8[16384]{0}', space=vmem, size = 0x4000, scoped, tag = 'output window, operand 0']
    %11 = vsyncpa [#allocation3], 0
    %s12 = scalar_lea.sflag [#allocation3], 1
    %13 = vsyncpa %s12, 0
    %14 = vsyncpa [#allocation6], 0
    %s15 = scalar_lea.sflag [#allocation6], 1
    %16 = vsyncpa %s15, 0
    %17 = vsyncpa [#allocation9], 0
    %18 = vsyncpa [#allocation4], 0
    %s19 = scalar_lea.sflag [#allocation4], 1
    %20 = vsyncpa %s19, 0
    loop: start=0, step=1, limit=4
    $region2: #{tpu_custom_call.1} parent=1 // loop_pre_header
      _
    $region3: #{tpu_custom_call.1} parent=1 // loop_header
      %s22 = sphi 0, %s26
      %p23 = scmp.ge.s32.totalorder %s22, 4
      %s29 = sphi 0, %s41
      %s30 = sphi 0, %s37
      %s31 = sphi 0, %s29
      %s32 = sphi 0, %s30
      %s33 = sphi 0, %s31
      %s34 = sphi 0, %s32
      %s46 = sphi 0, %s48
      %s49 = sphi 0, %s46
      %s50 = sphi 0, %s49
      %s66 = sphi 0, %s50
      %s72 = sphi 0, %s74
      %s75 = sphi 0, %s72
      %s76 = sphi 0, %s75
      %s92 = sphi 0, %s76
      %s96 = sphi 0, %s96
      %s98 = sphi 0, %s96
      %s99 = sphi 0, %s98
      %s113 = sphi 0, %s99
      %s117 = sphi 0, %s117
      %s119 = sphi 0, %s117
      %s120 = sphi 0, %s119
      %s134 = sphi 0, %s120
      %s138 = sphi 0, %s138
      %s140 = sphi 0, %s138
      %s141 = sphi 0, %s140
      %s155 = sphi 0, %s141
      %s159 = sphi 0, %s159
      %s161 = sphi 0, %s159
      %s162 = sphi 0, %s161
      %s176 = sphi 0, %s162
      %s184 = sphi 0, %s186
      %s187 = sphi 0, %s184
      %s188 = sphi 0, %s187
      %s204 = sphi 0, %s188
    $region4: #{tpu_custom_call.1} parent=1 // loop_header_branch
      %25 = sbr.rel (%p23) target = $region8
    $region5: #{tpu_custom_call.1} parent=1 // loop_body
      %s27 = ssub.s32 %s22, 1
      %s28 = ssub.s32 %s22, 2
      %s35 = sadd.s32 1, %s30
      %p36 = scmp.ge.s32.totalorder %s35, 1
      %s37 = scalar_select %p36, 0, %s35
      %s38 = sadd.s32 1, %s29
      %s39 = scalar_select %p36, %s38, %s29
      %p40 = scmp.ge.s32.totalorder %s39, 2
      %s41 = scalar_select %p40, 0, %s39
      %s42 = ssub.s32 %s29, %s41
      %s43 = ssub.s32 %s30, %s37
      %s44 = sor.u32 %s42, %s43
      %p45 = scmp.eq.s32.totalorder %s44, 0
      %s47 = sadd.s32 %s46, 1
      %s48 = scalar_select %p45, %s46, %s47
      %p51 = pneg %p45
      %p52 = scmp.eq.s32.totalorder %s22, 1
      %p53 = por %p51, %p52
      %p54 = scmp.ne.s32.totalorder %s46, %s49
      %p55 = scmp.eq.s32.totalorder %s22, 0
      %p56 = por %p54, %p55
      %p57 = scmp.ne.s32.totalorder %s46, %s49
      %p58 = scmp.eq.s32.totalorder %s27, 1
      %p59 = por %p57, %p58
      %p60 = scmp.ne.s32.totalorder %s49, %s50
      %p61 = scmp.eq.s32.totalorder %s27, 0
      %p62 = por %p60, %p61
      %p63 = scmp.ne.s32.totalorder %s49, %s50
      %p64 = scmp.eq.s32.totalorder %s28, 1
      %p65 = por %p63, %p64
      %p67 = scmp.ne.s32.totalorder %s50, %s66
      %p68 = scmp.eq.s32.totalorder %s28, 0
      %p69 = por %p67, %p68
      %s70 = ssub.s32 %s29, %s41
      %p71 = scmp.eq.s32.totalorder %s70, 0
      %s73 = sadd.s32 %s72, 1
      %s74 = scalar_select %p71, %s72, %s73
      %p77 = pneg %p71
      %p78 = scmp.eq.s32.totalorder %s22, 1
      %p79 = por %p77, %p78
      %p80 = scmp.ne.s32.totalorder %s72, %s75
      %p81 = scmp.eq.s32.totalorder %s22, 0
      %p82 = por %p80, %p81
      %p83 = scmp.ne.s32.totalorder %s72, %s75
      %p84 = scmp.eq.s32.totalorder %s27, 1
      %p85 = por %p83, %p84
      %p86 = scmp.ne.s32.totalorder %s75, %s76
      %p87 = scmp.eq.s32.totalorder %s27, 0
      %p88 = por %p86, %p87
      %p89 = scmp.ne.s32.totalorder %s75, %s76
      %p90 = scmp.eq.s32.totalorder %s28, 1
      %p91 = por %p89, %p90
      %p93 = scmp.ne.s32.totalorder %s76, %s92
      %p94 = scmp.eq.s32.totalorder %s28, 0
      %p95 = por %p93, %p94
      %s97 = sadd.s32 %s96, 1
      %p100 = scmp.eq.s32.totalorder %s22, 1
      %p101 = scmp.ne.s32.totalorder %s96, %s98
      %p102 = scmp.eq.s32.totalorder %s22, 0
      %p103 = por %p101, %p102
      %p104 = scmp.ne.s32.totalorder %s96, %s98
      %p105 = scmp.eq.s32.totalorder %s27, 1
      %p106 = por %p104, %p105
      %p107 = scmp.ne.s32.totalorder %s98, %s99
      %p108 = scmp.eq.s32.totalorder %s27, 0
      %p109 = por %p107, %p108
      %p110 = scmp.ne.s32.totalorder %s98, %s99
      %p111 = scmp.eq.s32.totalorder %s28, 1
      %p112 = por %p110, %p111
      %p114 = scmp.ne.s32.totalorder %s99, %s113
      %p115 = scmp.eq.s32.totalorder %s28, 0
      %p116 = por %p114, %p115
      %s118 = sadd.s32 %s117, 1
      %p121 = scmp.eq.s32.totalorder %s22, 1
      %p122 = scmp.ne.s32.totalorder %s117, %s119
      %p123 = scmp.eq.s32.totalorder %s22, 0
      %p124 = por %p122, %p123
      %p125 = scmp.ne.s32.totalorder %s117, %s119
      %p126 = scmp.eq.s32.totalorder %s27, 1
      %p127 = por %p125, %p126
      %p128 = scmp.ne.s32.totalorder %s119, %s120
      %p129 = scmp.eq.s32.totalorder %s27, 0
      %p130 = por %p128, %p129
      %p131 = scmp.ne.s32.totalorder %s119, %s120
      %p132 = scmp.eq.s32.totalorder %s28, 1
      %p133 = por %p131, %p132
      %p135 = scmp.ne.s32.totalorder %s120, %s134
      %p136 = scmp.eq.s32.totalorder %s28, 0
      %p137 = por %p135, %p136
      %s139 = sadd.s32 %s138, 1
      %p142 = scmp.eq.s32.totalorder %s22, 1
      %p143 = scmp.ne.s32.totalorder %s138, %s140
      %p144 = scmp.eq.s32.totalorder %s22, 0
      %p145 = por %p143, %p144
      %p146 = scmp.ne.s32.totalorder %s138, %s140
      %p147 = scmp.eq.s32.totalorder %s27, 1
      %p148 = por %p146, %p147
      %p149 = scmp.ne.s32.totalorder %s140, %s141
      %p150 = scmp.eq.s32.totalorder %s27, 0
      %p151 = por %p149, %p150
      %p152 = scmp.ne.s32.totalorder %s140, %s141
      %p153 = scmp.eq.s32.totalorder %s28, 1
      %p154 = por %p152, %p153
      %p156 = scmp.ne.s32.totalorder %s141, %s155
      %p157 = scmp.eq.s32.totalorder %s28, 0
      %p158 = por %p156, %p157
      %s160 = sadd.s32 %s159, 1
      %p163 = scmp.eq.s32.totalorder %s22, 1
      %p164 = scmp.ne.s32.totalorder %s159, %s161
      %p165 = scmp.eq.s32.totalorder %s22, 0
      %p166 = por %p164, %p165
      %p167 = scmp.ne.s32.totalorder %s159, %s161
      %p168 = scmp.eq.s32.totalorder %s27, 1
      %p169 = por %p167, %p168
      %p170 = scmp.ne.s32.totalorder %s161, %s162
      %p171 = scmp.eq.s32.totalorder %s27, 0
      %p172 = por %p170, %p171
      %p173 = scmp.ne.s32.totalorder %s161, %s162
      %p174 = scmp.eq.s32.totalorder %s28, 1
      %p175 = por %p173, %p174
      %p177 = scmp.ne.s32.totalorder %s162, %s176
      %p178 = scmp.eq.s32.totalorder %s28, 0
      %p179 = por %p177, %p178
      %s180 = ssub.s32 %s29, %s41
      %s181 = ssub.s32 %s30, %s37
      %s182 = sor.u32 %s180, %s181
      %p183 = scmp.eq.s32.totalorder %s182, 0
      %s185 = sadd.s32 %s184, 1
      %s186 = scalar_select %p183, %s184, %s185
      %p189 = pneg %p183
      %p190 = scmp.eq.s32.totalorder %s22, 1
      %p191 = por %p189, %p190
      %p192 = scmp.ne.s32.totalorder %s184, %s187
      %p193 = scmp.eq.s32.totalorder %s22, 0
      %p194 = por %p192, %p193
      %p195 = scmp.ne.s32.totalorder %s184, %s187
      %p196 = scmp.eq.s32.totalorder %s27, 1
      %p197 = por %p195, %p196
      %p198 = scmp.ne.s32.totalorder %s187, %s188
      %p199 = scmp.eq.s32.totalorder %s27, 0
      %p200 = por %p198, %p199
      %p201 = scmp.ne.s32.totalorder %s187, %s188
      %p202 = scmp.eq.s32.totalorder %s28, 1
      %p203 = por %p201, %p202
      %p205 = scmp.ne.s32.totalorder %s188, %s204
      %p206 = scmp.eq.s32.totalorder %s28, 0
      %p207 = por %p205, %p206
      %p208 = scmp.le.s32.totalorder 1, %s22
      %p209 = scmp.lt.s32.totalorder %s22, 3
      %p210 = pnand %p208, %p209
      %p211 = pneg %p210
      // Predicated region
      $region9: #{tpu_custom_call.1} parent=5 // pred_check
        _
      $region10: #{tpu_custom_call.1} parent=5 // pred_check_branch
        %213 = sbr.rel (%p210) target = $region12
      $region11: #{tpu_custom_call.1} parent=5 // pred_region
        %s214 = ssub.s32 %s22, 1
        // Predicated region
        $region13: #{tpu_custom_call.1} parent=11 // pred_check
          %p215 = pneg %p109
        $region14: #{tpu_custom_call.1} parent=11 // pred_check_branch
          %217 = sbr.rel (%p215) target = $region16
        $region15: #{tpu_custom_call.1} parent=11 // pred_region
          %s219 = ssub.s32 3072, 3072
          %220 = vsyncadd [#allocation6], %s219
          %s221 = sshll.u32 [#allocation7], 4
          %s222 = int_to_ptr.vmem [resolvable:$true] %s221
          %227 = dma.hbm_to_vmem [thread:$0]  %s2, 3072, %s222, [#allocation6], 128, 128, 8
        $region16: #{tpu_custom_call.1} parent=11 // pred_fallthru
          _
        // Predicated region
        $region17: #{tpu_custom_call.1} parent=11 // pred_check
          %p228 = pneg %p130
        $region18: #{tpu_custom_call.1} parent=11 // pred_check_branch
          %230 = sbr.rel (%p228) target = $region20
        $region19: #{tpu_custom_call.1} parent=11 // pred_region
          _
        $region20: #{tpu_custom_call.1} parent=11 // pred_fallthru
          _
        // Predicated region
        $region21: #{tpu_custom_call.1} parent=11 // pred_check
          %p231 = pneg %p151
        $region22: #{tpu_custom_call.1} parent=11 // pred_check_branch
          %233 = sbr.rel (%p231) target = $region24
        $region23: #{tpu_custom_call.1} parent=11 // pred_region
          %s235 = ssub.s32 3072, 3072
          %236 = vsyncadd [#allocation9], %s235
          %s237 = sshll.u32 [#allocation8], 4
          %s238 = int_to_ptr.vmem [resolvable:$true] %s237
          %243 = dma.hbm_to_vmem [thread:$0]  %s4, 3072, %s238, [#allocation9], 128, 128, 8
        $region24: #{tpu_custom_call.1} parent=11 // pred_fallthru
          _
        // Predicated region
        $region25: #{tpu_custom_call.1} parent=11 // pred_check
          %p244 = pneg %p172
        $region26: #{tpu_custom_call.1} parent=11 // pred_check_branch
          %246 = sbr.rel (%p244) target = $region28
        $region27: #{tpu_custom_call.1} parent=11 // pred_region
          _
        $region28: #{tpu_custom_call.1} parent=11 // pred_fallthru
          _
      $region12: #{tpu_custom_call.1} parent=5 // pred_fallthru
        _
      %p247 = scmp.lt.s32.totalorder %s22, 2
      // Predicated region
      $region29: #{tpu_custom_call.1} parent=5 // pred_check
        %p248 = pneg %p247
      $region30: #{tpu_custom_call.1} parent=5 // pred_check_branch
        %250 = sbr.rel (%p248) target = $region32
      $region31: #{tpu_custom_call.1} parent=5 // pred_region
        // Predicated region
        $region33: #{tpu_custom_call.1} parent=31 // pred_check
          %p251 = pneg %p56
        $region34: #{tpu_custom_call.1} parent=31 // pred_check_branch
          %253 = sbr.rel (%p251) target = $region36
        $region35: #{tpu_custom_call.1} parent=31 // pred_region
          %s254 = sand.u32 %s46, 1
          %s255 = scalar_lea.sflag [#allocation3], %s254
          %s256 = sand.u32 %s46, 1
          %s257 = smul.addr %s256, 16
          %s258 = scalar_lea.vmem [#allocation2], %s257
          %s259 = smul.u32 2, %s30
          %s261 = ssub.s32 256, 256
          %262 = vsyncadd %s255, %s261
          %s263 = smul.addr %s29, 2
          %s264 = sadd.s32 %s259, %s263
          %s265 = smul.addr %s264, 128
          %s266 = scalar_lea.hbm %s0, %s265
          %s267 = sshll.u32 %s258, 4
          %s268 = int_to_ptr.vmem [resolvable:$true] %s267
          %273 = dma.hbm_to_vmem [thread:$0]  %s266, 256, %s268, %s255, 128, 128, 8
        $region36: #{tpu_custom_call.1} parent=31 // pred_fallthru
          _
        // Predicated region
        $region37: #{tpu_custom_call.1} parent=31 // pred_check
          %p274 = pneg %p82
        $region38: #{tpu_custom_call.1} parent=31 // pred_check_branch
          %276 = sbr.rel (%p274) target = $region40
        $region39: #{tpu_custom_call.1} parent=31 // pred_region
          %s277 = sand.u32 %s22, 1
          %s278 = scalar_lea.sflag [#allocation6], %s277
          %s279 = sand.u32 %s72, 1
          %s280 = smul.addr %s279, 16
          %s281 = scalar_lea.vmem [#allocation5], %s280
          %s283 = ssub.s32 256, 256
          %284 = vsyncadd %s278, %s283
          %s285 = smul.addr %s29, 2
          %s286 = smul.addr %s285, 128
          %s287 = scalar_lea.hbm %s1, %s286
          %s288 = sshll.u32 %s281, 4
          %s289 = int_to_ptr.vmem [resolvable:$true] %s288
          %294 = dma.hbm_to_vmem [thread:$0]  %s287, 256, %s289, %s278, 128, 128, 8
        $region40: #{tpu_custom_call.1} parent=31 // pred_fallthru
          _
      $region32: #{tpu_custom_call.1} parent=5 // pred_fallthru
        _
      %p295 = scmp.le.s32.totalorder 1, %s22
      %p296 = scmp.lt.s32.totalorder %s22, 3
      %p297 = pnand %p295, %p296
      %p298 = pneg %p297
      // Predicated region
      $region41: #{tpu_custom_call.1} parent=5 // pred_check
        _
      $region42: #{tpu_custom_call.1} parent=5 // pred_check_branch
        %300 = sbr.rel (%p297) target = $region44
      $region43: #{tpu_custom_call.1} parent=5 // pred_region
        %s301 = ssub.s32 %s22, 1
        %s302 = sand.u32 %s49, 1
        %s303 = scalar_lea.sflag [#allocation3], %s302
        %s304 = sand.u32 %s49, 1
        %s305 = smul.addr %s304, 16
        %s306 = scalar_lea.vmem [#allocation2], %s305
        // Predicated region
        $region45: #{tpu_custom_call.1} parent=43 // pred_check
          %p307 = pneg %p62
        $region46: #{tpu_custom_call.1} parent=43 // pred_check_branch
          %309 = sbr.rel (%p307) target = $region48
        $region47: #{tpu_custom_call.1} parent=43 // pred_region
          %310 = dma.done %s303, 256
        $region48: #{tpu_custom_call.1} parent=43 // pred_fallthru
          _
        %s311 = sand.u32 %s27, 1
        %s312 = scalar_lea.sflag [#allocation6], %s311
        %s313 = sand.u32 %s75, 1
        %s314 = smul.addr %s313, 16
        %s315 = scalar_lea.vmem [#allocation5], %s314
        // Predicated region
        $region49: #{tpu_custom_call.1} parent=43 // pred_check
          %p316 = pneg %p88
        $region50: #{tpu_custom_call.1} parent=43 // pred_check_branch
          %318 = sbr.rel (%p316) target = $region52
        $region51: #{tpu_custom_call.1} parent=43 // pred_region
          %319 = dma.done %s312, 256
        $region52: #{tpu_custom_call.1} parent=43 // pred_fallthru
          _
        // Predicated region
        $region53: #{tpu_custom_call.1} parent=43 // pred_check
          %p320 = pneg %p109
        $region54: #{tpu_custom_call.1} parent=43 // pred_check_branch
          %322 = sbr.rel (%p320) target = $region56
        $region55: #{tpu_custom_call.1} parent=43 // pred_region
          %323 = dma.done [#allocation6], 3072
        $region56: #{tpu_custom_call.1} parent=43 // pred_fallthru
          _
        // Predicated region
        $region57: #{tpu_custom_call.1} parent=43 // pred_check
          %p324 = pneg %p151
        $region58: #{tpu_custom_call.1} parent=43 // pred_check_branch
          %326 = sbr.rel (%p324) target = $region60
        $region59: #{tpu_custom_call.1} parent=43 // pred_region
          %327 = dma.done [#allocation9], 3072
        $region60: #{tpu_custom_call.1} parent=43 // pred_fallthru
          _
        %s328 = sand.u32 %s49, 1
        %s329 = scalar_lea.sflag [#allocation3], %s328
        %s330 = sand.u32 %s49, 1
        %s331 = smul.addr %s330, 16
        %s332 = scalar_lea.vmem [#allocation2], %s331
        %p333 = pneg %p62
        %p334 = pneg %p59
        %s335 = sand.u32 %s27, 1
        %s336 = scalar_lea.sflag [#allocation6], %s335
        %s337 = sand.u32 %s75, 1
        %s338 = smul.addr %s337, 16
        %s339 = scalar_lea.vmem [#allocation5], %s338
        %p340 = pneg %p88
        %p341 = pneg %p85
        %p342 = pneg %p109
        %p343 = pneg %p106
        %p344 = pneg %p130
        %p345 = pneg %p127
        %p346 = pneg %p151
        %p347 = pneg %p148
        %p348 = pneg %p172
        %p349 = pneg %p169
        %p350 = pneg %p200
        %p351 = pneg %p197
        %s352 = sand.u32 %s187, 1
        %s353 = scalar_lea.sflag [#allocation4], %s352
        %s354 = sand.u32 %s187, 1
        %s355 = smul.addr %s354, 16
        %s356 = scalar_lea.vmem [#allocation10], %s355
        %s357 = smul.u32 2, %s32
        %s358 = smul.u32 2, %s32
        %s359 = smul.u32 %s32, 16
        %s360 = scalar_lea.vmem %s315, %s359 [#allocation5]
        %v361 = vld [vmem:[%s360] sm:$0xff]
        %v362 = vld [vmem:[%s360 + $0x8] sm:$0xff]
        %s363 = ssub.s32 %s359, 2
        %p364 = scmp.gt.s32.totalorder %s363, 0
        %s365 = scalar_select %p364, %s363, 0
        %s366 = scalar_lea.vmem %s315, %s365 [#allocation5]
        %v367 = vld [vmem:[%s366] sm:$0x3]
        %s368 = sadd.s32 %s359, 16
        %p369 = scmp.lt.s32.totalorder %s368, 14
        %s370 = scalar_select %p369, %s368, 14
        %s371 = scalar_lea.vmem %s315, %s370 [#allocation5]
        %v372 = vld [vmem:[%s371] sm:$0x3]
        %vm375 = vcmask 1041408
        %v376 = vrot.slane %v361, 6
        %v377 = vrot.slane %v362, 6
        %v378 = vsel %vm375, %v376, %v377
        %v383 = vrot.slane %v372, 6
        %v385 = vsel %vm375, %v367, %v376
        %v386 = vsel %vm375, %v377, %v383
        %v387 = vlaneseq
        %v388 = vshrl.u32 %v387, 7
        %v389 = vadd.s32 %v388, 8
        %v390 = vadd.s32 %v388, 16
        %v391 = vstv %s363
        %v392 = vadd.s32 %v388, %v391
        %v393 = vadd.s32 %v389, %v391
        %v394 = vadd.s32 %v390, %v391
        %vm395 = vcmp.ge.s32.totalorder %v392, 0
        %vm396 = vcmp.ge.s32.totalorder %v393, 0
        %vm397 = vcmp.ge.s32.totalorder %v394, 0
        %vm398 = vcmp.lt.s32.totalorder %v392, 16
        %vm399 = vcmp.lt.s32.totalorder %v393, 16
        %vm400 = vcmp.lt.s32.totalorder %v394, 16
        %vm401 = vmand %vm395, %vm398
        %vm402 = vmand %vm396, %vm399
        %vm403 = vmand %vm397, %vm400
        %v404 = vsel %vm401, 1, 0
        %v405 = vsel %vm402, 1, 0
        %v406 = vsel %vm403, 1, 0
        %vm407 = vcmp.eq.s32.totalorder %v404, 1
        %vm408 = vcmp.eq.s32.totalorder %v405, 1
        %vm409 = vcmp.eq.s32.totalorder %v406, 1
        %v410 = vsel %vm407, %v385, 0.0
        %v411 = vsel %vm408, %v378, 0.0
        %v412 = vsel %vm409, %v386, 0.0
        %v413 = vld [vmem:[#allocation7] sm:$0xff]
        %v414 = vld [vmem:[#allocation7 + $0x8] sm:$0xff]
        %v415 = vld [vmem:[#allocation7 + $0x10] sm:$0xff]
        %v416 = vld [vmem:[#allocation7 + $0x18] sm:$0xff]
        %v417 = vld [vmem:[#allocation7 + $0x20] sm:$0xff]
        %v418 = vld [vmem:[#allocation7 + $0x28] sm:$0xff]
        %v419 = vld [vmem:[#allocation7 + $0x30] sm:$0xff]
        %v420 = vld [vmem:[#allocation7 + $0x38] sm:$0xff]
        %s421 = scalar_lea.vmem [#allocation7], 64
        %v422 = vld [vmem:[%s421] sm:$0xff]
        %v423 = vld [vmem:[%s421 + $0x8] sm:$0xff]
        %v424 = vld [vmem:[%s421 + $0x10] sm:$0xff]
        %v425 = vld [vmem:[%s421 + $0x18] sm:$0xff]
        %v426 = vld [vmem:[%s421 + $0x20] sm:$0xff]
        %v427 = vld [vmem:[%s421 + $0x28] sm:$0xff]
        %v428 = vld [vmem:[%s421 + $0x30] sm:$0xff]
        %v429 = vld [vmem:[%s421 + $0x38] sm:$0xff]
        %vm433 = vcmask 1046528
        %v434 = vrot.slane %v410, 1
        %v435 = vrot.slane %v411, 1
        %v436 = vsel %vm433, %v434, %v435
        %v437 = vrot.slane %v412, 1
        %v438 = vsel %vm433, %v435, %v437
        %vm439 = vcmask 523264
        %v440 = vsel %vm439, %v436, 0
        %v442 = vsel %vm439, %v438, 0
        %v444 = vsel %vm439, %v437, 0
        %446 = vmatprep.subr.mxu0 0.0
        %447 = vmatpush1.msra.mxu0 %v422
        %448 = vmatprep.subr.mxu0 0.0
        %449 = vmatpush1.msra.mxu0 %v423
        %450 = vmatprep.subr.mxu0 0.0
        %451 = vmatpush1.msra.mxu0 %v424
        %452 = vmatprep.subr.mxu0 0.0
        %453 = vmatpush1.msra.mxu0 %v425
        %454 = vmatprep.subr.mxu0 0.0
        %455 = vmatpush1.msra.mxu0 %v426
        %456 = vmatprep.subr.mxu0 0.0
        %457 = vmatpush1.msra.mxu0 %v427
        %458 = vmatprep.subr.mxu0 0.0
        %459 = vmatpush1.msra.mxu0 %v428
        %460 = vmatprep.subr.mxu0 0.0
        %461 = vmatpush1.msra.mxu0 %v429
        %462 = vmatprep.subr.mxu0 0.0
        %463 = vmatpush1.msra.mxu0 0.0
        %464 = vmatprep.subr.mxu0 0.0
        %465 = vmatpush1.msra.mxu0 0.0
        %466 = vmatprep.subr.mxu0 0.0
        %467 = vmatpush1.msra.mxu0 0.0
        %468 = vmatprep.subr.mxu0 0.0
        %469 = vmatpush1.msra.mxu0 0.0
        %470 = vmatprep.subr.mxu0 0.0
        %471 = vmatpush1.msra.mxu0 0.0
        %472 = vmatprep.subr.mxu0 0.0
        %473 = vmatpush1.msra.mxu0 0.0
        %474 = vmatprep.subr.mxu0 0.0
        %475 = vmatpush1.msra.mxu0 0.0
        %476 = vmatprep.subr.mxu0 0.0
        %477 = vmatpush1.msra.mxu0 0.0
        %478 = vmatprep.subr.mxu0 0.0
        %479 = vmatpush1.msra.mxu0 0.0
        %480 = vmatprep.subr.mxu0 0.0
        %481 = vmatpush1.msra.mxu0 0.0
        %482 = vmatprep.subr.mxu0 0.0
        %483 = vmatpush1.msra.mxu0 0.0
        %484 = vmatprep.subr.mxu0 0.0
        %485 = vmatpush1.msra.mxu0 0.0
        %486 = vmatprep.subr.mxu0 0.0
        %487 = vmatpush1.msra.mxu0 0.0
        %488 = vmatprep.subr.mxu0 0.0
        %489 = vmatpush1.msra.mxu0 0.0
        %490 = vmatprep.subr.mxu0 0.0
        %491 = vmatpush1.msra.mxu0 0.0
        %492 = vmatprep.subr.mxu0 0.0
        %493 = vmatpush1.msra.mxu0 0.0
        %494 = vmatprep.subr.mxu0 0.0
        %495 = vmatpush1.msra.mxu0 0.0
        %496 = vmatprep.subr.mxu0 0.0
        %497 = vmatpush1.msra.mxu0 0.0
        %498 = vmatprep.subr.mxu0 0.0
        %499 = vmatpush1.msra.mxu0 0.0
        %500 = vmatprep.subr.mxu0 0.0
        %501 = vmatpush1.msra.mxu0 0.0
        %502 = vmatprep.subr.mxu0 0.0
        %503 = vmatpush1.msra.mxu0 0.0
        %504 = vmatprep.subr.mxu0 0.0
        %505 = vmatpush1.msra.mxu0 0.0
        %506 = vmatprep.subr.mxu0 0.0
        %507 = vmatpush1.msra.mxu0 0.0
        %508 = vmatprep.subr.mxu0 0.0
        %509 = vmatpush1.msra.mxu0 0.0
        %510 = vmatprep.mubr.f32.mxu0 0.0
        %511 = vmatmul.mubr.f32.gmra.mrb[0].mxu0 %v440
        %v512 = vpop.f32.mrb[0].mxu0
        %v513 = vadd.f32 0.0, %v512
        %v514 = vpop.f32.mrb[0].mxu0
        %515 = vmatprep.mubr.f32.mxu0 0.0
        %516 = vmatmul.mubr.f32.gmra.mrb[0].mxu0 %v442
        %v517 = vpop.f32.mrb[0].mxu0
        %v518 = vadd.f32 0.0, %v517
        %v519 = vpop.f32.mrb[0].mxu0
        %520 = vmatprep.mubr.f32.mxu0 0.0
        %521 = vmatmul.mubr.f32.gmra.mrb[0].mxu0 %v444
        %v522 = vpop.f32.mrb[0].mxu0
        %v523 = vadd.f32 0.0, %v522
        %v524 = vpop.f32.mrb[0].mxu0
        %525 = vdwg.mxu0
        %v526 = vsel %vm439, %v410, 0
        %v528 = vsel %vm439, %v411, 0
        %v530 = vsel %vm439, %v412, 0
        %532 = vmatprep.subr.mxu0 0.0
        %533 = vmatpush1.msra.mxu0 %v413
        %534 = vmatprep.subr.mxu0 0.0
        %535 = vmatpush1.msra.mxu0 %v414
        %536 = vmatprep.subr.mxu0 0.0
        %537 = vmatpush1.msra.mxu0 %v415
        %538 = vmatprep.subr.mxu0 0.0
        %539 = vmatpush1.msra.mxu0 %v416
        %540 = vmatprep.subr.mxu0 0.0
        %541 = vmatpush1.msra.mxu0 %v417
        %542 = vmatprep.subr.mxu0 0.0
        %543 = vmatpush1.msra.mxu0 %v418
        %544 = vmatprep.subr.mxu0 0.0
        %545 = vmatpush1.msra.mxu0 %v419
        %546 = vmatprep.subr.mxu0 0.0
        %547 = vmatpush1.msra.mxu0 %v420
        %548 = vmatprep.subr.mxu0 0.0
        %549 = vmatpush1.msra.mxu0 0.0
        %550 = vmatprep.subr.mxu0 0.0
        %551 = vmatpush1.msra.mxu0 0.0
        %552 = vmatprep.subr.mxu0 0.0
        %553 = vmatpush1.msra.mxu0 0.0
        %554 = vmatprep.subr.mxu0 0.0
        %555 = vmatpush1.msra.mxu0 0.0
        %556 = vmatprep.subr.mxu0 0.0
        %557 = vmatpush1.msra.mxu0 0.0
        %558 = vmatprep.subr.mxu0 0.0
        %559 = vmatpush1.msra.mxu0 0.0
        %560 = vmatprep.subr.mxu0 0.0
        %561 = vmatpush1.msra.mxu0 0.0
        %562 = vmatprep.subr.mxu0 0.0
        %563 = vmatpush1.msra.mxu0 0.0
        %564 = vmatprep.subr.mxu0 0.0
        %565 = vmatpush1.msra.mxu0 0.0
        %566 = vmatprep.subr.mxu0 0.0
        %567 = vmatpush1.msra.mxu0 0.0
        %568 = vmatprep.subr.mxu0 0.0
        %569 = vmatpush1.msra.mxu0 0.0
        %570 = vmatprep.subr.mxu0 0.0
        %571 = vmatpush1.msra.mxu0 0.0
        %572 = vmatprep.subr.mxu0 0.0
        %573 = vmatpush1.msra.mxu0 0.0
        %574 = vmatprep.subr.mxu0 0.0
        %575 = vmatpush1.msra.mxu0 0.0
        %576 = vmatprep.subr.mxu0 0.0
        %577 = vmatpush1.msra.mxu0 0.0
        %578 = vmatprep.subr.mxu0 0.0
        %579 = vmatpush1.msra.mxu0 0.0
        %580 = vmatprep.subr.mxu0 0.0
        %581 = vmatpush1.msra.mxu0 0.0
        %582 = vmatprep.subr.mxu0 0.0
        %583 = vmatpush1.msra.mxu0 0.0
        %584 = vmatprep.subr.mxu0 0.0
        %585 = vmatpush1.msra.mxu0 0.0
        %586 = vmatprep.subr.mxu0 0.0
        %587 = vmatpush1.msra.mxu0 0.0
        %588 = vmatprep.subr.mxu0 0.0
        %589 = vmatpush1.msra.mxu0 0.0
        %590 = vmatprep.subr.mxu0 0.0
        %591 = vmatpush1.msra.mxu0 0.0
        %592 = vmatprep.subr.mxu0 0.0
        %593 = vmatpush1.msra.mxu0 0.0
        %594 = vmatprep.subr.mxu0 0.0
        %595 = vmatpush1.msra.mxu0 0.0
        %596 = vmatprep.mubr.f32.mxu0 0.0
        %597 = vmatmul.mubr.f32.gmra.mrb[0].mxu0 %v526
        %v598 = vpop.f32.mrb[0].mxu0
        %v599 = vadd.f32 %v513, %v598
        %v600 = vpop.f32.mrb[0].mxu0
        %601 = vmatprep.mubr.f32.mxu0 0.0
        %602 = vmatmul.mubr.f32.gmra.mrb[0].mxu0 %v528
        %v603 = vpop.f32.mrb[0].mxu0
        %v604 = vadd.f32 %v518, %v603
        %v605 = vpop.f32.mrb[0].mxu0
        %606 = vmatprep.mubr.f32.mxu0 0.0
        %607 = vmatmul.mubr.f32.gmra.mrb[0].mxu0 %v530
        %v608 = vpop.f32.mrb[0].mxu0
        %v609 = vadd.f32 %v523, %v608
        %v610 = vpop.f32.mrb[0].mxu0
        %611 = vdwg.mxu0
        %s612 = scalar_lea.vmem [#allocation7], 128
        %v613 = vld [vmem:[%s612] sm:$0xff]
        %v614 = vld [vmem:[%s612 + $0x8] sm:$0xff]
        %v615 = vld [vmem:[%s612 + $0x10] sm:$0xff]
        %v616 = vld [vmem:[%s612 + $0x18] sm:$0xff]
        %v617 = vld [vmem:[%s612 + $0x20] sm:$0xff]
        %v618 = vld [vmem:[%s612 + $0x28] sm:$0xff]
        %v619 = vld [vmem:[%s612 + $0x30] sm:$0xff]
        %v620 = vld [vmem:[%s612 + $0x38] sm:$0xff]
        %vm621 = vcmask 1045504
        %v622 = vrot.slane %v410, 2
        %v623 = vrot.slane %v411, 2
        %v624 = vsel %vm621, %v622, %v623
        %v625 = vrot.slane %v412, 2
        %v626 = vsel %vm621, %v623, %v625
        %v627 = vsel %vm439, %v624, 0
        %v629 = vsel %vm439, %v626, 0
        %v631 = vsel %vm439, %v625, 0
        %633 = vmatprep.subr.mxu0 0.0
        %634 = vmatpush1.msra.mxu0 %v613
        %635 = vmatprep.subr.mxu0 0.0
        %636 = vmatpush1.msra.mxu0 %v614
        %637 = vmatprep.subr.mxu0 0.0
        %638 = vmatpush1.msra.mxu0 %v615
        %639 = vmatprep.subr.mxu0 0.0
        %640 = vmatpush1.msra.mxu0 %v616
        %641 = vmatprep.subr.mxu0 0.0
        %642 = vmatpush1.msra.mxu0 %v617
        %643 = vmatprep.subr.mxu0 0.0
        %644 = vmatpush1.msra.mxu0 %v618
        %645 = vmatprep.subr.mxu0 0.0
        %646 = vmatpush1.msra.mxu0 %v619
        %647 = vmatprep.subr.mxu0 0.0
        %648 = vmatpush1.msra.mxu0 %v620
        %649 = vmatprep.subr.mxu0 0.0
        %650 = vmatpush1.msra.mxu0 0.0
        %651 = vmatprep.subr.mxu0 0.0
        %652 = vmatpush1.msra.mxu0 0.0
        %653 = vmatprep.subr.mxu0 0.0
        %654 = vmatpush1.msra.mxu0 0.0
        %655 = vmatprep.subr.mxu0 0.0
        %656 = vmatpush1.msra.mxu0 0.0
        %657 = vmatprep.subr.mxu0 0.0
        %658 = vmatpush1.msra.mxu0 0.0
        %659 = vmatprep.subr.mxu0 0.0
        %660 = vmatpush1.msra.mxu0 0.0
        %661 = vmatprep.subr.mxu0 0.0
        %662 = vmatpush1.msra.mxu0 0.0
        %663 = vmatprep.subr.mxu0 0.0
        %664 = vmatpush1.msra.mxu0 0.0
        %665 = vmatprep.subr.mxu0 0.0
        %666 = vmatpush1.msra.mxu0 0.0
        %667 = vmatprep.subr.mxu0 0.0
        %668 = vmatpush1.msra.mxu0 0.0
        %669 = vmatprep.subr.mxu0 0.0
        %670 = vmatpush1.msra.mxu0 0.0
        %671 = vmatprep.subr.mxu0 0.0
        %672 = vmatpush1.msra.mxu0 0.0
        %673 = vmatprep.subr.mxu0 0.0
        %674 = vmatpush1.msra.mxu0 0.0
        %675 = vmatprep.subr.mxu0 0.0
        %676 = vmatpush1.msra.mxu0 0.0
        %677 = vmatprep.subr.mxu0 0.0
        %678 = vmatpush1.msra.mxu0 0.0
        %679 = vmatprep.subr.mxu0 0.0
        %680 = vmatpush1.msra.mxu0 0.0
        %681 = vmatprep.subr.mxu0 0.0
        %682 = vmatpush1.msra.mxu0 0.0
        %683 = vmatprep.subr.mxu0 0.0
        %684 = vmatpush1.msra.mxu0 0.0
        %685 = vmatprep.subr.mxu0 0.0
        %686 = vmatpush1.msra.mxu0 0.0
        %687 = vmatprep.subr.mxu0 0.0
        %688 = vmatpush1.msra.mxu0 0.0
        %689 = vmatprep.subr.mxu0 0.0
        %690 = vmatpush1.msra.mxu0 0.0
        %691 = vmatprep.subr.mxu0 0.0
        %692 = vmatpush1.msra.mxu0 0.0
        %693 = vmatprep.subr.mxu0 0.0
        %694 = vmatpush1.msra.mxu0 0.0
        %695 = vmatprep.subr.mxu0 0.0
        %696 = vmatpush1.msra.mxu0 0.0
        %697 = vmatprep.mubr.f32.mxu0 0.0
        %698 = vmatmul.mubr.f32.gmra.mrb[0].mxu0 %v627
        %v699 = vpop.f32.mrb[0].mxu0
        %v700 = vadd.f32 0.0, %v699
        %v701 = vpop.f32.mrb[0].mxu0
        %702 = vmatprep.mubr.f32.mxu0 0.0
        %703 = vmatmul.mubr.f32.gmra.mrb[0].mxu0 %v629
        %v704 = vpop.f32.mrb[0].mxu0
        %v705 = vadd.f32 0.0, %v704
        %v706 = vpop.f32.mrb[0].mxu0
        %707 = vmatprep.mubr.f32.mxu0 0.0
        %708 = vmatmul.mubr.f32.gmra.mrb[0].mxu0 %v631
        %v709 = vpop.f32.mrb[0].mxu0
        %v710 = vadd.f32 0.0, %v709
        %v711 = vpop.f32.mrb[0].mxu0
        %712 = vdwg.mxu0
        %v713 = vadd.f32 %v599, %v700
        %v714 = vadd.f32 %v604, %v705
        %v715 = vadd.f32 %v609, %v710
        %v716 = vld [vmem:[%s3] sm:$0x1]
        %v718 = vlaneseq
        %v719 = vshrl.u32 %v718, 7
        %v720 = vsub.s32 0, %v719
        %v721 = vrot.slane %v716, %v720
        %v723 = vadd.f32 %v713, %v721
        %v724 = vadd.f32 %v714, %v721
        %v725 = vadd.f32 %v715, %v721
        %v726 = vmax.f32 %v723, 0.0
        %v727 = vmax.f32 %v724, 0.0
        %v728 = vmax.f32 %v725, 0.0
        %s729 = ssub.s32 %s359, 1
        %v730 = vstv %s729
        %v731 = vadd.s32 %v388, %v730
        %v732 = vadd.s32 %v389, %v730
        %v733 = vadd.s32 %v390, %v730
        %vm734 = vcmp.ge.s32.totalorder %v731, 0
        %vm735 = vcmp.ge.s32.totalorder %v732, 0
        %vm736 = vcmp.ge.s32.totalorder %v733, 0
        %vm737 = vcmp.lt.s32.totalorder %v731, 16
        %vm738 = vcmp.lt.s32.totalorder %v732, 16
        %vm739 = vcmp.lt.s32.totalorder %v733, 16
        %vm740 = vmand %vm734, %vm737
        %vm741 = vmand %vm735, %vm738
        %vm742 = vmand %vm736, %vm739
        %v743 = vsel %vm740, 1, 0
        %v744 = vsel %vm741, 1, 0
        %v745 = vsel %vm742, 1, 0
        %vm746 = vcmp.eq.s32.totalorder %v743, 1
        %vm747 = vcmp.eq.s32.totalorder %v744, 1
        %vm748 = vcmp.eq.s32.totalorder %v745, 1
        %v749 = vsel %vm746, %v726, 0.0
        %v750 = vsel %vm747, %v727, 0.0
        %v751 = vsel %vm748, %v728, 0.0
        %v752 = vld [vmem:[#allocation8] sm:$0xff]
        %v753 = vld [vmem:[#allocation8 + $0x8] sm:$0xff]
        %v754 = vld [vmem:[#allocation8 + $0x10] sm:$0xff]
        %v755 = vld [vmem:[#allocation8 + $0x18] sm:$0xff]
        %v756 = vld [vmem:[#allocation8 + $0x20] sm:$0xff]
        %v757 = vld [vmem:[#allocation8 + $0x28] sm:$0xff]
        %v758 = vld [vmem:[#allocation8 + $0x30] sm:$0xff]
        %v759 = vld [vmem:[#allocation8 + $0x38] sm:$0xff]
        %s760 = scalar_lea.vmem [#allocation8], 64
        %v761 = vld [vmem:[%s760] sm:$0xff]
        %v762 = vld [vmem:[%s760 + $0x8] sm:$0xff]
        %v763 = vld [vmem:[%s760 + $0x10] sm:$0xff]
        %v764 = vld [vmem:[%s760 + $0x18] sm:$0xff]
        %v765 = vld [vmem:[%s760 + $0x20] sm:$0xff]
        %v766 = vld [vmem:[%s760 + $0x28] sm:$0xff]
        %v767 = vld [vmem:[%s760 + $0x30] sm:$0xff]
        %v768 = vld [vmem:[%s760 + $0x38] sm:$0xff]
        %v772 = vrot.slane %v749, 1
        %v773 = vrot.slane %v750, 1
        %v774 = vsel %vm433, %v772, %v773
        %v775 = vrot.slane %v751, 1
        %v776 = vsel %vm433, %v773, %v775
        %v777 = vsel %vm439, %v774, 0
        %v779 = vsel %vm439, %v776, 0
        %781 = vmatprep.subr.mxu0 0.0
        %782 = vmatpush1.msra.mxu0 %v761
        %783 = vmatprep.subr.mxu0 0.0
        %784 = vmatpush1.msra.mxu0 %v762
        %785 = vmatprep.subr.mxu0 0.0
        %786 = vmatpush1.msra.mxu0 %v763
        %787 = vmatprep.subr.mxu0 0.0
        %788 = vmatpush1.msra.mxu0 %v764
        %789 = vmatprep.subr.mxu0 0.0
        %790 = vmatpush1.msra.mxu0 %v765
        %791 = vmatprep.subr.mxu0 0.0
        %792 = vmatpush1.msra.mxu0 %v766
        %793 = vmatprep.subr.mxu0 0.0
        %794 = vmatpush1.msra.mxu0 %v767
        %795 = vmatprep.subr.mxu0 0.0
        %796 = vmatpush1.msra.mxu0 %v768
        %797 = vmatprep.subr.mxu0 0.0
        %798 = vmatpush1.msra.mxu0 0.0
        %799 = vmatprep.subr.mxu0 0.0
        %800 = vmatpush1.msra.mxu0 0.0
        %801 = vmatprep.subr.mxu0 0.0
        %802 = vmatpush1.msra.mxu0 0.0
        %803 = vmatprep.subr.mxu0 0.0
        %804 = vmatpush1.msra.mxu0 0.0
        %805 = vmatprep.subr.mxu0 0.0
        %806 = vmatpush1.msra.mxu0 0.0
        %807 = vmatprep.subr.mxu0 0.0
        %808 = vmatpush1.msra.mxu0 0.0
        %809 = vmatprep.subr.mxu0 0.0
        %810 = vmatpush1.msra.mxu0 0.0
        %811 = vmatprep.subr.mxu0 0.0
        %812 = vmatpush1.msra.mxu0 0.0
        %813 = vmatprep.subr.mxu0 0.0
        %814 = vmatpush1.msra.mxu0 0.0
        %815 = vmatprep.subr.mxu0 0.0
        %816 = vmatpush1.msra.mxu0 0.0
        %817 = vmatprep.subr.mxu0 0.0
        %818 = vmatpush1.msra.mxu0 0.0
        %819 = vmatprep.subr.mxu0 0.0
        %820 = vmatpush1.msra.mxu0 0.0
        %821 = vmatprep.subr.mxu0 0.0
        %822 = vmatpush1.msra.mxu0 0.0
        %823 = vmatprep.subr.mxu0 0.0
        %824 = vmatpush1.msra.mxu0 0.0
        %825 = vmatprep.subr.mxu0 0.0
        %826 = vmatpush1.msra.mxu0 0.0
        %827 = vmatprep.subr.mxu0 0.0
        %828 = vmatpush1.msra.mxu0 0.0
        %829 = vmatprep.subr.mxu0 0.0
        %830 = vmatpush1.msra.mxu0 0.0
        %831 = vmatprep.subr.mxu0 0.0
        %832 = vmatpush1.msra.mxu0 0.0
        %833 = vmatprep.subr.mxu0 0.0
        %834 = vmatpush1.msra.mxu0 0.0
        %835 = vmatprep.subr.mxu0 0.0
        %836 = vmatpush1.msra.mxu0 0.0
        %837 = vmatprep.subr.mxu0 0.0
        %838 = vmatpush1.msra.mxu0 0.0
        %839 = vmatprep.subr.mxu0 0.0
        %840 = vmatpush1.msra.mxu0 0.0
        %841 = vmatprep.subr.mxu0 0.0
        %842 = vmatpush1.msra.mxu0 0.0
        %843 = vmatprep.subr.mxu0 0.0
        %844 = vmatpush1.msra.mxu0 0.0
        %845 = vmatprep.mubr.f32.mxu0 0.0
        %846 = vmatmul.mubr.f32.gmra.mrb[0].mxu0 %v777
        %v847 = vpop.f32.mrb[0].mxu0
        %v848 = vadd.f32 0.0, %v847
        %v849 = vpop.f32.mrb[0].mxu0
        %850 = vmatprep.mubr.f32.mxu0 0.0
        %851 = vmatmul.mubr.f32.gmra.mrb[0].mxu0 %v779
        %v852 = vpop.f32.mrb[0].mxu0
        %v853 = vadd.f32 0.0, %v852
        %v854 = vpop.f32.mrb[0].mxu0
        %855 = vdwg.mxu0
        %v856 = vsel %vm439, %v749, 0
        %v858 = vsel %vm439, %v750, 0
        %860 = vmatprep.subr.mxu0 0.0
        %861 = vmatpush1.msra.mxu0 %v752
        %862 = vmatprep.subr.mxu0 0.0
        %863 = vmatpush1.msra.mxu0 %v753
        %864 = vmatprep.subr.mxu0 0.0
        %865 = vmatpush1.msra.mxu0 %v754
        %866 = vmatprep.subr.mxu0 0.0
        %867 = vmatpush1.msra.mxu0 %v755
        %868 = vmatprep.subr.mxu0 0.0
        %869 = vmatpush1.msra.mxu0 %v756
        %870 = vmatprep.subr.mxu0 0.0
        %871 = vmatpush1.msra.mxu0 %v757
        %872 = vmatprep.subr.mxu0 0.0
        %873 = vmatpush1.msra.mxu0 %v758
        %874 = vmatprep.subr.mxu0 0.0
        %875 = vmatpush1.msra.mxu0 %v759
        %876 = vmatprep.subr.mxu0 0.0
        %877 = vmatpush1.msra.mxu0 0.0
        %878 = vmatprep.subr.mxu0 0.0
        %879 = vmatpush1.msra.mxu0 0.0
        %880 = vmatprep.subr.mxu0 0.0
        %881 = vmatpush1.msra.mxu0 0.0
        %882 = vmatprep.subr.mxu0 0.0
        %883 = vmatpush1.msra.mxu0 0.0
        %884 = vmatprep.subr.mxu0 0.0
        %885 = vmatpush1.msra.mxu0 0.0
        %886 = vmatprep.subr.mxu0 0.0
        %887 = vmatpush1.msra.mxu0 0.0
        %888 = vmatprep.subr.mxu0 0.0
        %889 = vmatpush1.msra.mxu0 0.0
        %890 = vmatprep.subr.mxu0 0.0
        %891 = vmatpush1.msra.mxu0 0.0
        %892 = vmatprep.subr.mxu0 0.0
        %893 = vmatpush1.msra.mxu0 0.0
        %894 = vmatprep.subr.mxu0 0.0
        %895 = vmatpush1.msra.mxu0 0.0
        %896 = vmatprep.subr.mxu0 0.0
        %897 = vmatpush1.msra.mxu0 0.0
        %898 = vmatprep.subr.mxu0 0.0
        %899 = vmatpush1.msra.mxu0 0.0
        %900 = vmatprep.subr.mxu0 0.0
        %901 = vmatpush1.msra.mxu0 0.0
        %902 = vmatprep.subr.mxu0 0.0
        %903 = vmatpush1.msra.mxu0 0.0
        %904 = vmatprep.subr.mxu0 0.0
        %905 = vmatpush1.msra.mxu0 0.0
        %906 = vmatprep.subr.mxu0 0.0
        %907 = vmatpush1.msra.mxu0 0.0
        %908 = vmatprep.subr.mxu0 0.0
        %909 = vmatpush1.msra.mxu0 0.0
        %910 = vmatprep.subr.mxu0 0.0
        %911 = vmatpush1.msra.mxu0 0.0
        %912 = vmatprep.subr.mxu0 0.0
        %913 = vmatpush1.msra.mxu0 0.0
        %914 = vmatprep.subr.mxu0 0.0
        %915 = vmatpush1.msra.mxu0 0.0
        %916 = vmatprep.subr.mxu0 0.0
        %917 = vmatpush1.msra.mxu0 0.0
        %918 = vmatprep.subr.mxu0 0.0
        %919 = vmatpush1.msra.mxu0 0.0
        %920 = vmatprep.subr.mxu0 0.0
        %921 = vmatpush1.msra.mxu0 0.0
        %922 = vmatprep.subr.mxu0 0.0
        %923 = vmatpush1.msra.mxu0 0.0
        %924 = vmatprep.mubr.f32.mxu0 0.0
        %925 = vmatmul.mubr.f32.gmra.mrb[0].mxu0 %v856
        %v926 = vpop.f32.mrb[0].mxu0
        %v927 = vadd.f32 %v848, %v926
        %v928 = vpop.f32.mrb[0].mxu0
        %929 = vmatprep.mubr.f32.mxu0 0.0
        %930 = vmatmul.mubr.f32.gmra.mrb[0].mxu0 %v858
        %v931 = vpop.f32.mrb[0].mxu0
        %v932 = vadd.f32 %v853, %v931
        %v933 = vpop.f32.mrb[0].mxu0
        %934 = vdwg.mxu0
        %s935 = scalar_lea.vmem [#allocation8], 128
        %v936 = vld [vmem:[%s935] sm:$0xff]
        %v937 = vld [vmem:[%s935 + $0x8] sm:$0xff]
        %v938 = vld [vmem:[%s935 + $0x10] sm:$0xff]
        %v939 = vld [vmem:[%s935 + $0x18] sm:$0xff]
        %v940 = vld [vmem:[%s935 + $0x20] sm:$0xff]
        %v941 = vld [vmem:[%s935 + $0x28] sm:$0xff]
        %v942 = vld [vmem:[%s935 + $0x30] sm:$0xff]
        %v943 = vld [vmem:[%s935 + $0x38] sm:$0xff]
        %v944 = vrot.slane %v749, 2
        %v945 = vrot.slane %v750, 2
        %v946 = vsel %vm621, %v944, %v945
        %v947 = vrot.slane %v751, 2
        %v948 = vsel %vm621, %v945, %v947
        %v949 = vsel %vm439, %v946, 0
        %v951 = vsel %vm439, %v948, 0
        %953 = vmatprep.subr.mxu0 0.0
        %954 = vmatpush1.msra.mxu0 %v936
        %955 = vmatprep.subr.mxu0 0.0
        %956 = vmatpush1.msra.mxu0 %v937
        %957 = vmatprep.subr.mxu0 0.0
        %958 = vmatpush1.msra.mxu0 %v938
        %959 = vmatprep.subr.mxu0 0.0
        %960 = vmatpush1.msra.mxu0 %v939
        %961 = vmatprep.subr.mxu0 0.0
        %962 = vmatpush1.msra.mxu0 %v940
        %963 = vmatprep.subr.mxu0 0.0
        %964 = vmatpush1.msra.mxu0 %v941
        %965 = vmatprep.subr.mxu0 0.0
        %966 = vmatpush1.msra.mxu0 %v942
        %967 = vmatprep.subr.mxu0 0.0
        %968 = vmatpush1.msra.mxu0 %v943
        %969 = vmatprep.subr.mxu0 0.0
        %970 = vmatpush1.msra.mxu0 0.0
        %971 = vmatprep.subr.mxu0 0.0
        %972 = vmatpush1.msra.mxu0 0.0
        %973 = vmatprep.subr.mxu0 0.0
        %974 = vmatpush1.msra.mxu0 0.0
        %975 = vmatprep.subr.mxu0 0.0
        %976 = vmatpush1.msra.mxu0 0.0
        %977 = vmatprep.subr.mxu0 0.0
        %978 = vmatpush1.msra.mxu0 0.0
        %979 = vmatprep.subr.mxu0 0.0
        %980 = vmatpush1.msra.mxu0 0.0
        %981 = vmatprep.subr.mxu0 0.0
        %982 = vmatpush1.msra.mxu0 0.0
        %983 = vmatprep.subr.mxu0 0.0
        %984 = vmatpush1.msra.mxu0 0.0
        %985 = vmatprep.subr.mxu0 0.0
        %986 = vmatpush1.msra.mxu0 0.0
        %987 = vmatprep.subr.mxu0 0.0
        %988 = vmatpush1.msra.mxu0 0.0
        %989 = vmatprep.subr.mxu0 0.0
        %990 = vmatpush1.msra.mxu0 0.0
        %991 = vmatprep.subr.mxu0 0.0
        %992 = vmatpush1.msra.mxu0 0.0
        %993 = vmatprep.subr.mxu0 0.0
        %994 = vmatpush1.msra.mxu0 0.0
        %995 = vmatprep.subr.mxu0 0.0
        %996 = vmatpush1.msra.mxu0 0.0
        %997 = vmatprep.subr.mxu0 0.0
        %998 = vmatpush1.msra.mxu0 0.0
        %999 = vmatprep.subr.mxu0 0.0
        %1000 = vmatpush1.msra.mxu0 0.0
        %1001 = vmatprep.subr.mxu0 0.0
        %1002 = vmatpush1.msra.mxu0 0.0
        %1003 = vmatprep.subr.mxu0 0.0
        %1004 = vmatpush1.msra.mxu0 0.0
        %1005 = vmatprep.subr.mxu0 0.0
        %1006 = vmatpush1.msra.mxu0 0.0
        %1007 = vmatprep.subr.mxu0 0.0
        %1008 = vmatpush1.msra.mxu0 0.0
        %1009 = vmatprep.subr.mxu0 0.0
        %1010 = vmatpush1.msra.mxu0 0.0
        %1011 = vmatprep.subr.mxu0 0.0
        %1012 = vmatpush1.msra.mxu0 0.0
        %1013 = vmatprep.subr.mxu0 0.0
        %1014 = vmatpush1.msra.mxu0 0.0
        %1015 = vmatprep.subr.mxu0 0.0
        %1016 = vmatpush1.msra.mxu0 0.0
        %1017 = vmatprep.mubr.f32.mxu0 0.0
        %1018 = vmatmul.mubr.f32.gmra.mrb[0].mxu0 %v949
        %v1019 = vpop.f32.mrb[0].mxu0
        %v1020 = vadd.f32 0.0, %v1019
        %v1021 = vpop.f32.mrb[0].mxu0
        %1022 = vmatprep.mubr.f32.mxu0 0.0
        %1023 = vmatmul.mubr.f32.gmra.mrb[0].mxu0 %v951
        %v1024 = vpop.f32.mrb[0].mxu0
        %v1025 = vadd.f32 0.0, %v1024
        %v1026 = vpop.f32.mrb[0].mxu0
        %1027 = vdwg.mxu0
        %v1028 = vadd.f32 %v927, %v1020
        %v1029 = vadd.f32 %v932, %v1025
        %v1030 = vld [vmem:[%s5] sm:$0x1]
        %v1032 = vlaneseq
        %v1033 = vshrl.u32 %v1032, 7
        %v1034 = vsub.s32 0, %v1033
        %v1035 = vrot.slane %v1030, %v1034
        %v1037 = vadd.f32 %v1028, %v1035
        %v1038 = vadd.f32 %v1029, %v1035
        %v1039 = vld [vmem:[%s306] sm:$0xff]
        %v1040 = vld [vmem:[%s306 + $0x8] sm:$0xff]
        %v1041 = vxor.u32 %v1037, 2147483648
        %v1042 = vxor.u32 %v1038, 2147483648
        %v1043 = vmul.f32 %v1041, 1.442695
        %v1044 = vpow.pop %v1043
        %v1045 = vmul.f32 %v1042, 1.442695
        %v1046 = vpow.pop %v1045
        %v1047 = vadd.f32 %v1044, 1.0
        %v1048 = vadd.f32 %v1046, 1.0
        %v1049 = vrcp.pop %v1047
        %v1050 = vmul.f32 1.0, %v1049
        %v1051 = vrcp.pop %v1048
        %v1052 = vmul.f32 1.0, %v1051
        %v1053 = vmul.f32 %v1039, %v1050
        %v1054 = vmul.f32 %v1040, %v1052
        %1055 = vst.msk [vmem:[%s356] sm:$0xff] %vm439, %v1053
        %1056 = vst.msk [vmem:[%s356 + $0x8] sm:$0xff] %vm439, %v1054
        %s1057 = sand.u32 %s187, 1
        %s1058 = scalar_lea.sflag [#allocation4], %s1057
        %s1059 = sand.u32 %s187, 1
        %s1060 = smul.addr %s1059, 16
        %s1061 = scalar_lea.vmem [#allocation10], %s1060
        // Predicated region
        $region61: #{tpu_custom_call.1} parent=43 // pred_check
          %p1062 = pneg %p197
        $region62: #{tpu_custom_call.1} parent=43 // pred_check_branch
          %1064 = sbr.rel (%p1062) target = $region64
        $region63: #{tpu_custom_call.1} parent=43 // pred_region
          %s1065 = smul.u32 2, %s32
          %s1067 = ssub.s32 256, 256
          %1068 = vsyncadd %s1058, %s1067
          %s1069 = smul.addr %s31, 2
          %s1070 = sadd.s32 %s1065, %s1069
          %s1071 = smul.addr %s1070, 128
          %s1072 = scalar_lea.hbm %s6, %s1071
          %s1073 = sshll.u32 %s1061, 4
          %s1074 = int_to_ptr.vmem [resolvable:$true] %s1073
          %1079 = dma.vmem_to_hbm [thread:$0]  %s1074, 256, %s1072, %s1058, 128, 128, 8
        $region64: #{tpu_custom_call.1} parent=43 // pred_fallthru
          _
      $region44: #{tpu_custom_call.1} parent=5 // pred_fallthru
        _
      %p1080 = scmp.le.s32.totalorder 2, %s22
      // Predicated region
      $region65: #{tpu_custom_call.1} parent=5 // pred_check
        %p1081 = pneg %p1080
      $region66: #{tpu_custom_call.1} parent=5 // pred_check_branch
        %1083 = sbr.rel (%p1081) target = $region68
      $region67: #{tpu_custom_call.1} parent=5 // pred_region
        %s1084 = ssub.s32 %s22, 2
        // Predicated region
        $region69: #{tpu_custom_call.1} parent=67 // pred_check
          %p1085 = pneg %p203
        $region70: #{tpu_custom_call.1} parent=67 // pred_check_branch
          %1087 = sbr.rel (%p1085) target = $region72
        $region71: #{tpu_custom_call.1} parent=67 // pred_region
          %s1088 = sand.u32 %s188, 1
          %s1089 = scalar_lea.sflag [#allocation4], %s1088
          %s1090 = sand.u32 %s188, 1
          %s1091 = smul.addr %s1090, 16
          %s1092 = scalar_lea.vmem [#allocation10], %s1091
          %1093 = dma.done %s1089, 256
        $region72: #{tpu_custom_call.1} parent=67 // pred_fallthru
          _
      $region68: #{tpu_custom_call.1} parent=5 // pred_fallthru
        _
    $region6: #{tpu_custom_call.1} parent=1 // loop_footer
      %s26 = sadd.s32 1, %s22
    $region7: #{tpu_custom_call.1} parent=1 // loop_footer_branch
      %21 = sbr.rel target = $region3
    $region8: #{tpu_custom_call.1} parent=1 // loop_exit
      _
    %1094 = vsyncpa [#allocation3], 1
    %s1095 = scalar_lea.sflag [#allocation3], 1
    %1096 = vsyncpa %s1095, 1
    %1097 = vsyncpa [#allocation6], 1
    %s1098 = scalar_lea.sflag [#allocation6], 1
    %1099 = vsyncpa %s1098, 1
    %1100 = vsyncpa [#allocation9], 1
    %1101 = vsyncpa [#allocation4], 1
    %s1102 = scalar_lea.sflag [#allocation4], 1
    %1103 = vsyncpa %s1102, 1

</llo_original>
